<compile_context>
chip_gen: v7x
topology: tpu7x:2x2x1
jax: 0.10.0
libtpu: 0.0.40
codegen_flags: <defaults>
</compile_context>

<pallas_src>
import jax
import jax.numpy as jnp
from jax.experimental import pallas as pl
from jax.experimental.pallas import tpu as pltpu

_LANE = 128                 # vreg lane width
_MAX_BLOCK_ROWS = 4096      # 2 MiB f32 / array / buffer -> 12 MiB double-buffered (fits v5e default)
_MIN_BLOCK_ROWS = 1024      # >= 512 KiB blocks so per-step overhead is amortized
_TARGET_BLOCKS = 8          # enough grid steps for v7x's 2 TensorCores to shard
_FASTPATH_MAX_ELEMS = 128 * 1024   # below this, fused XLA beats a pallas_call launch


def _attack_kernel(delta_ref, pert_ref, x_ref, out_ref):
    # delta lives in SMEM: free scalar load, changing it never recompiles.
    delta = delta_ref[0]
    # tanh -> EUP slot, mul/add -> VPU slack; compute in f32, store as out dtype.
    p = pert_ref[...].astype(jnp.float32)
    x = x_ref[...].astype(jnp.float32)
    out_ref[...] = (delta * jnp.tanh(p) + x).astype(out_ref.dtype)


def _pick_block_rows(rows):
    """Block row count: multiple of 8, 512 KiB-2 MiB per array, >= ~8 blocks."""
    br = pl.cdiv(rows, _TARGET_BLOCKS)
    br = max(_MIN_BLOCK_ROWS, min(_MAX_BLOCK_ROWS, br))
    br = ((br + 7) // 8) * 8                  # sublane (8) alignment of block shape
    br = min(br, ((rows + 7) // 8) * 8)       # never larger than the (rounded) array
    return max(br, 8)


def attack_forward(x, perturbation, delta):
    """Pallas equivalent of Attack.forward: delta * tanh(perturbation) + x."""
    assert x.shape == perturbation.shape, (x.shape, perturbation.shape)
    orig_shape = x.shape
    out_dtype = jnp.result_type(x.dtype, perturbation.dtype)
    n = x.size

    delta_f32 = jnp.asarray(delta, dtype=jnp.float32)

    # ---- tiny-input fast path: one fused XLA elementwise pass ----
    if n <= _FASTPATH_MAX_ELEMS:
        out = delta_f32 * jnp.tanh(perturbation.astype(jnp.float32)) + x.astype(jnp.float32)
        return out.astype(out_dtype)

    # ---- lane-dense flattening: (...,) -> (rows, 128) ----
    rows = pl.cdiv(n, _LANE)
    pad = rows * _LANE - n          # < 128 elements; zero in the common case

    def _prep(a):
        a = a.reshape(-1)           # free (contiguous) reshape
        if pad:
            a = jnp.pad(a, (0, pad))
        return a.reshape(rows, _LANE)

    x2 = _prep(x)
    p2 = _prep(perturbation)

    block_rows = _pick_block_rows(rows)
    num_blocks = pl.cdiv(rows, block_rows)   # ragged last block handled by Pallas
    tile = pl.BlockSpec((block_rows, _LANE), lambda i: (i, 0))

    cost = pl.CostEstimate(
        flops=2 * n,
        transcendentals=n,
        bytes_accessed=n * (x.dtype.itemsize
                            + perturbation.dtype.itemsize
                            + jnp.dtype(out_dtype).itemsize),
    )

    out2 = pl.pallas_call(
        _attack_kernel,
        out_shape=jax.ShapeDtypeStruct((rows, _LANE), out_dtype),
        grid_spec=pl.GridSpec(
            grid=(num_blocks,),
            in_specs=[
                pl.BlockSpec(memory_space=pltpu.MemorySpace.SMEM),  # delta scalar
                tile,                                               # perturbation
                tile,                                               # x
            ],
            out_specs=tile,
        ),
        compiler_params=pltpu.CompilerParams(
            dimension_semantics=("parallel",),
        ),
        cost_estimate=cost,
    )(delta_f32.reshape(1), p2, x2)

    out = out2.reshape(-1)
    if pad:
        out = out[:n]
    return out.reshape(orig_shape).astype(out_dtype)


def reference_forward(x, perturbation, delta):
    return delta * jnp.tanh(perturbation) + x


if __name__ == "__main__":
    # Shapes implied by Attack.__init__: (bs, seq_len, enc_in)
    bs, seq_len, enc_in, pred_len = 2, 8, 32, 4
    delta = 0.1

    key = jax.random.PRNGKey(0)
    kx, kp, k1, k2, k3, k4 = jax.random.split(key, 6)

    x = jax.random.normal(kx, (bs, seq_len, enc_in), dtype=jnp.float32)
    perturbation = 0.5 * jax.random.normal(kp, (bs, seq_len, enc_in), dtype=jnp.float32)
    perturbation_zero = jnp.zeros((bs, seq_len, enc_in), dtype=jnp.float32)
    # adversarial_target exists in the module but is unused in forward.
    adversarial_target = jnp.zeros((bs, pred_len, enc_in), dtype=jnp.float32)  # noqa: F841

    # Module-default small shape (takes the fused fast path).
    out = jax.block_until_ready(attack_forward(x, perturbation, delta))
    ref = reference_forward(x, perturbation, delta)
    out_zero = jax.block_until_ready(attack_forward(x, perturbation_zero, delta))

    # Pallas path 1: lane-aligned, evenly tiled, multiple "parallel" blocks.
    sa = (8, 512, 128)     # n = 524288 -> rows = 4096, pad = 0, 4 blocks of 1024 rows
    xa = jax.random.normal(k1, sa, dtype=jnp.float32)
    pa = jax.random.normal(k2, sa, dtype=jnp.float32)
    out_a = jax.block_until_ready(attack_forward(xa, pa, delta))
    ref_a = reference_forward(xa, pa, delta)

    # Pallas path 2: n % 128 != 0 and ragged last block.
    sb = (3, 700, 97)      # n = 203700 -> rows = 1592, pad = 76, 2 blocks of 1024 rows
    xb = jax.random.normal(k3, sb, dtype=jnp.float32)
    pb = jax.random.normal(k4, sb, dtype=jnp.float32)
    out_b = jax.block_until_ready(attack_forward(xb, pb, delta))
    ref_b = reference_forward(xb, pb, delta)

    assert out.shape == (bs, seq_len, enc_in)
    assert out.dtype == jnp.float32
    assert jnp.allclose(out, ref, atol=1e-6, rtol=1e-6)
    assert jnp.allclose(out_zero, x, atol=1e-6, rtol=1e-6)      # zero-init param -> identity
    assert out_a.shape == sa and jnp.allclose(out_a, ref_a, atol=1e-6, rtol=1e-6)
    assert out_b.shape == sb and jnp.allclose(out_b, ref_b, atol=1e-6, rtol=1e-6)

    print("KERNEL_OK")
</pallas_src>

<mosaic_0001>
module attributes {stable_mosaic.version = 11 : i64} {
  func.func @_attack_kernel(%arg0: i32, %arg1: memref<1xf32, #tpu.memory_space<smem>>, %arg2: memref<1024x128xf32, #tpu.memory_space<vmem>>, %arg3: memref<1024x128xf32, #tpu.memory_space<vmem>>, %arg4: memref<1024x128xf32, #tpu.memory_space<vmem>>) attributes {dimension_semantics = [#tpu.dimension_semantics<parallel>], iteration_bounds = array<i64: 4>, scalar_prefetch = 0 : i64, scratch_operands = 0 : i64, tpu.core_type = #tpu.core_type<tc>, window_params = [{transform_indices = @transform_0, window_bounds = array<i64: 1>}, {transform_indices = @transform_1, window_bounds = array<i64: 1024, 128>}, {transform_indices = @transform_2, window_bounds = array<i64: 1024, 128>}, {transform_indices = @transform_3, window_bounds = array<i64: 1024, 128>}]} {
    %c0 = arith.constant 0 : index
    %0 = memref.load %arg1[%c0] : memref<1xf32, #tpu.memory_space<smem>>
    %c0_0 = arith.constant 0 : index
    %c0_1 = arith.constant 0 : index
    %1 = vector.load %arg2[%c0_0, %c0_1] : memref<1024x128xf32, #tpu.memory_space<vmem>>, vector<1024x128xf32>
    %c0_2 = arith.constant 0 : index
    %c0_3 = arith.constant 0 : index
    %2 = vector.load %arg3[%c0_2, %c0_3] : memref<1024x128xf32, #tpu.memory_space<vmem>>, vector<1024x128xf32>
    %3 = math.tanh %1 : vector<1024x128xf32>
    %4 = vector.broadcast %0 : f32 to vector<1024x128xf32>
    %5 = arith.mulf %4, %3 : vector<1024x128xf32>
    %6 = arith.addf %5, %2 : vector<1024x128xf32>
    %c0_4 = arith.constant 0 : index
    %c0_5 = arith.constant 0 : index
    %7 = vector.load %arg4[%c0_4, %c0_5] : memref<1024x128xf32, #tpu.memory_space<vmem>>, vector<1024x128xf32>
    tpu.vector_store %arg4[%c0_4, %c0_5], %6 {strides = array<i32>} : memref<1024x128xf32, #tpu.memory_space<vmem>>, vector<1024x128xf32>,
    return
  }
  func.func @transform_0(%arg0: i32) -> i32 {
    %c0_i32 = arith.constant 0 : i32
    %c0_i32_0 = arith.constant 0 : i32
    return %c0_i32 : i32
  }
  func.func @transform_1(%arg0: i32) -> (i32, i32) {
    %c0_i32 = arith.constant 0 : i32
    %c0_i32_0 = arith.constant 0 : i32
    return %arg0, %c0_i32 : i32, i32
  }
  func.func @transform_2(%arg0: i32) -> (i32, i32) {
    %c0_i32 = arith.constant 0 : i32
    %c0_i32_0 = arith.constant 0 : i32
    return %arg0, %c0_i32 : i32, i32
  }
  func.func @transform_3(%arg0: i32) -> (i32, i32) {
    %c0_i32 = arith.constant 0 : i32
    %c0_i32_0 = arith.constant 0 : i32
    return %arg0, %c0_i32 : i32, i32
  }
}

</mosaic_0001>

<llo_original>
// kernel: tpu_custom_call.1
$region0: #{tpu_custom_call.1}
  #allocation0 [shape = 'u32[]', space=smem, size = 0x4, offset = 0x4, fixed_abs, tag = 'smem constant byte address 0x4 - core index']
  #allocation1 [shape = 'u32[144,128]{1,0:T(1,128)}', space=vmem, size = 0x12000, scoped, tag = 'internal scratch']
  #allocation2 [shape = 'f32[1]{0:T(128)S(6)}', space=smem, size = 0x200, scoped, tag = 'scoped memory for tpu_custom_call.1']
  %s0 = inlined_call_operand.<no memory space> [shape: f32[1], index: 0, kind: input, shape index: {}]
  %s1 = inlined_call_operand.hbm [shape: f32[4096,128], index: 1, kind: input, shape index: {}]
  %s2 = inlined_call_operand.hbm [shape: f32[4096,128], index: 2, kind: input, shape index: {}]
  %s3 = inlined_call_operand.hbm [shape: f32[4096,128], index: 3, kind: output, shape index: {}]
  %s4 = sld [smem:[#allocation0]]
  $region53: #{tpu_custom_call.1} parent=0
    _
  %s6 = ssub.s32 1, %s4
  %s7 = scalar_select 0, %s6, %s4
  %8 = sst [smem:[#allocation2]] %s0
  $region1: #{tpu_custom_call.1} parent=0
    #allocation3 [shape = 'u8[1048576]{0}', space=vmem, size = 0x100000, scoped, tag = 'input window, operand 1']
    #allocation4 [shape = 's32[2]{0}', space=sflag, size = 0x8, scoped, tag = 'scoped memory for tpu_custom_call.1']
    #allocation5 [shape = 's32[2]{0}', space=sflag, size = 0x8, scoped, tag = 'scoped memory for tpu_custom_call.1']
    #allocation6 [shape = 'u8[1048576]{0}', space=vmem, size = 0x100000, scoped, tag = 'input window, operand 2']
    #allocation7 [shape = 's32[2]{0}', space=sflag, size = 0x8, scoped, tag = 'scoped memory for tpu_custom_call.1']
    #allocation8 [shape = 'u8[1048576]{0}', space=vmem, size = 0x100000, scoped, tag = 'output window, operand 0']
    %9 = vsyncpa [#allocation4], 0
    %s10 = scalar_lea.sflag [#allocation4], 1
    %11 = vsyncpa %s10, 0
    %12 = vsyncpa [#allocation7], 0
    %s13 = scalar_lea.sflag [#allocation7], 1
    %14 = vsyncpa %s13, 0
    %15 = vsyncpa [#allocation5], 0
    %s16 = scalar_lea.sflag [#allocation5], 1
    %17 = vsyncpa %s16, 0
    loop: start=0, step=1, limit=6
    $region2: #{tpu_custom_call.1} parent=1 // loop_pre_header
      _
    $region3: #{tpu_custom_call.1} parent=1 // loop_header
      %s19 = sphi 0, %s23
      %p20 = scmp.ge.s32.totalorder %s19, 6
      %s27 = sphi 0, %s27
      %s29 = sphi 0, %s27
      %s30 = sphi 0, %s29
      %s44 = sphi 0, %s30
      %s50 = sphi 0, %s52
      %s53 = sphi 0, %s50
      %s54 = sphi 0, %s53
      %s70 = sphi 0, %s54
      %s76 = sphi 0, %s78
      %s79 = sphi 0, %s76
      %s80 = sphi 0, %s79
      %s96 = sphi 0, %s80
      %s102 = sphi 0, %s104
      %s105 = sphi 0, %s102
      %s106 = sphi 0, %s105
      %s122 = sphi 0, %s106
    $region4: #{tpu_custom_call.1} parent=1 // loop_header_branch
      %22 = sbr.rel (%p20) target = $region8
    $region5: #{tpu_custom_call.1} parent=1 // loop_body
      %s24 = ssub.s32 %s19, 1
      %s25 = ssub.s32 %s19, 2
      %s26 = sadd.s32 %s19, 1
      %s28 = sadd.s32 %s27, 1
      %p31 = scmp.eq.s32.totalorder %s19, 3
      %p32 = scmp.ne.s32.totalorder %s27, %s29
      %p33 = scmp.eq.s32.totalorder %s19, 0
      %p34 = por %p32, %p33
      %p35 = scmp.ne.s32.totalorder %s27, %s29
      %p36 = scmp.eq.s32.totalorder %s24, 3
      %p37 = por %p35, %p36
      %p38 = scmp.ne.s32.totalorder %s29, %s30
      %p39 = scmp.eq.s32.totalorder %s24, 0
      %p40 = por %p38, %p39
      %p41 = scmp.ne.s32.totalorder %s29, %s30
      %p42 = scmp.eq.s32.totalorder %s25, 3
      %p43 = por %p41, %p42
      %p45 = scmp.ne.s32.totalorder %s30, %s44
      %p46 = scmp.eq.s32.totalorder %s25, 0
      %p47 = por %p45, %p46
      %s48 = ssub.s32 %s19, %s26
      %p49 = scmp.eq.s32.totalorder %s48, 0
      %s51 = sadd.s32 %s50, 1
      %s52 = scalar_select %p49, %s50, %s51
      %p55 = pneg %p49
      %p56 = scmp.eq.s32.totalorder %s19, 3
      %p57 = por %p55, %p56
      %p58 = scmp.ne.s32.totalorder %s50, %s53
      %p59 = scmp.eq.s32.totalorder %s19, 0
      %p60 = por %p58, %p59
      %p61 = scmp.ne.s32.totalorder %s50, %s53
      %p62 = scmp.eq.s32.totalorder %s24, 3
      %p63 = por %p61, %p62
      %p64 = scmp.ne.s32.totalorder %s53, %s54
      %p65 = scmp.eq.s32.totalorder %s24, 0
      %p66 = por %p64, %p65
      %p67 = scmp.ne.s32.totalorder %s53, %s54
      %p68 = scmp.eq.s32.totalorder %s25, 3
      %p69 = por %p67, %p68
      %p71 = scmp.ne.s32.totalorder %s54, %s70
      %p72 = scmp.eq.s32.totalorder %s25, 0
      %p73 = por %p71, %p72
      %s74 = ssub.s32 %s19, %s26
      %p75 = scmp.eq.s32.totalorder %s74, 0
      %s77 = sadd.s32 %s76, 1
      %s78 = scalar_select %p75, %s76, %s77
      %p81 = pneg %p75
      %p82 = scmp.eq.s32.totalorder %s19, 3
      %p83 = por %p81, %p82
      %p84 = scmp.ne.s32.totalorder %s76, %s79
      %p85 = scmp.eq.s32.totalorder %s19, 0
      %p86 = por %p84, %p85
      %p87 = scmp.ne.s32.totalorder %s76, %s79
      %p88 = scmp.eq.s32.totalorder %s24, 3
      %p89 = por %p87, %p88
      %p90 = scmp.ne.s32.totalorder %s79, %s80
      %p91 = scmp.eq.s32.totalorder %s24, 0
      %p92 = por %p90, %p91
      %p93 = scmp.ne.s32.totalorder %s79, %s80
      %p94 = scmp.eq.s32.totalorder %s25, 3
      %p95 = por %p93, %p94
      %p97 = scmp.ne.s32.totalorder %s80, %s96
      %p98 = scmp.eq.s32.totalorder %s25, 0
      %p99 = por %p97, %p98
      %s100 = ssub.s32 %s19, %s26
      %p101 = scmp.eq.s32.totalorder %s100, 0
      %s103 = sadd.s32 %s102, 1
      %s104 = scalar_select %p101, %s102, %s103
      %p107 = pneg %p101
      %p108 = scmp.eq.s32.totalorder %s19, 3
      %p109 = por %p107, %p108
      %p110 = scmp.ne.s32.totalorder %s102, %s105
      %p111 = scmp.eq.s32.totalorder %s19, 0
      %p112 = por %p110, %p111
      %p113 = scmp.ne.s32.totalorder %s102, %s105
      %p114 = scmp.eq.s32.totalorder %s24, 3
      %p115 = por %p113, %p114
      %p116 = scmp.ne.s32.totalorder %s105, %s106
      %p117 = scmp.eq.s32.totalorder %s24, 0
      %p118 = por %p116, %p117
      %p119 = scmp.ne.s32.totalorder %s105, %s106
      %p120 = scmp.eq.s32.totalorder %s25, 3
      %p121 = por %p119, %p120
      %p123 = scmp.ne.s32.totalorder %s106, %s122
      %p124 = scmp.eq.s32.totalorder %s25, 0
      %p125 = por %p123, %p124
      %p126 = scmp.le.s32.totalorder 1, %s19
      %p127 = scmp.lt.s32.totalorder %s19, 5
      %p128 = pnand %p126, %p127
      %p129 = pneg %p128
      // Predicated region
      $region9: #{tpu_custom_call.1} parent=5 // pred_check
        _
      $region10: #{tpu_custom_call.1} parent=5 // pred_check_branch
        %131 = sbr.rel (%p128) target = $region12
      $region11: #{tpu_custom_call.1} parent=5 // pred_region
        %s132 = ssub.s32 %s19, 1
        // Predicated region
        $region13: #{tpu_custom_call.1} parent=11 // pred_check
          %p133 = pneg %p40
        $region14: #{tpu_custom_call.1} parent=11 // pred_check_branch
          %135 = sbr.rel (%p133) target = $region16
        $region15: #{tpu_custom_call.1} parent=11 // pred_region
          _
        $region16: #{tpu_custom_call.1} parent=11 // pred_fallthru
          _
      $region12: #{tpu_custom_call.1} parent=5 // pred_fallthru
        _
      %p136 = scmp.lt.s32.totalorder %s19, 4
      // Predicated region
      $region17: #{tpu_custom_call.1} parent=5 // pred_check
        %p137 = pneg %p136
      $region18: #{tpu_custom_call.1} parent=5 // pred_check_branch
        %139 = sbr.rel (%p137) target = $region20
      $region19: #{tpu_custom_call.1} parent=5 // pred_region
        // Predicated region
        $region21: #{tpu_custom_call.1} parent=19 // pred_check
          %p140 = pneg %p60
        $region22: #{tpu_custom_call.1} parent=19 // pred_check_branch
          %142 = sbr.rel (%p140) target = $region24
        $region23: #{tpu_custom_call.1} parent=19 // pred_region
          %s143 = sand.u32 %s50, 1
          %s144 = scalar_lea.sflag [#allocation4], %s143
          %s145 = sand.u32 %s50, 1
          %s146 = smul.addr %s145, 1024
          %s147 = scalar_lea.vmem [#allocation3], %s146
          %s148 = smul.u32 128, %s19
          %s150 = ssub.s32 16384, 16384
          %151 = vsyncadd %s144, %s150
          %s152 = smul.addr %s148, 128
          %s153 = scalar_lea.hbm %s1, %s152
          %s154 = sshll.u32 %s147, 4
          %s155 = int_to_ptr.vmem [resolvable:$true] %s154
          %160 = dma.hbm_to_vmem [thread:$0]  %s153, 16384, %s155, %s144, 128, 128, 8
        $region24: #{tpu_custom_call.1} parent=19 // pred_fallthru
          _
        // Predicated region
        $region25: #{tpu_custom_call.1} parent=19 // pred_check
          %p161 = pneg %p86
        $region26: #{tpu_custom_call.1} parent=19 // pred_check_branch
          %163 = sbr.rel (%p161) target = $region28
        $region27: #{tpu_custom_call.1} parent=19 // pred_region
          %s164 = sand.u32 %s76, 1
          %s165 = scalar_lea.sflag [#allocation7], %s164
          %s166 = sand.u32 %s76, 1
          %s167 = smul.addr %s166, 1024
          %s168 = scalar_lea.vmem [#allocation6], %s167
          %s169 = smul.u32 128, %s19
          %s171 = ssub.s32 16384, 16384
          %172 = vsyncadd %s165, %s171
          %s173 = smul.addr %s169, 128
          %s174 = scalar_lea.hbm %s2, %s173
          %s175 = sshll.u32 %s168, 4
          %s176 = int_to_ptr.vmem [resolvable:$true] %s175
          %181 = dma.hbm_to_vmem [thread:$0]  %s174, 16384, %s176, %s165, 128, 128, 8
        $region28: #{tpu_custom_call.1} parent=19 // pred_fallthru
          _
      $region20: #{tpu_custom_call.1} parent=5 // pred_fallthru
        _
      %p182 = scmp.le.s32.totalorder 1, %s19
      %p183 = scmp.lt.s32.totalorder %s19, 5
      %p184 = pnand %p182, %p183
      %p185 = pneg %p184
      // Predicated region
      $region29: #{tpu_custom_call.1} parent=5 // pred_check
        _
      $region30: #{tpu_custom_call.1} parent=5 // pred_check_branch
        %187 = sbr.rel (%p184) target = $region32
      $region31: #{tpu_custom_call.1} parent=5 // pred_region
        %s188 = ssub.s32 %s19, 1
        %s189 = sand.u32 %s53, 1
        %s190 = scalar_lea.sflag [#allocation4], %s189
        %s191 = sand.u32 %s53, 1
        %s192 = smul.addr %s191, 1024
        %s193 = scalar_lea.vmem [#allocation3], %s192
        // Predicated region
        $region33: #{tpu_custom_call.1} parent=31 // pred_check
          %p194 = pneg %p66
        $region34: #{tpu_custom_call.1} parent=31 // pred_check_branch
          %196 = sbr.rel (%p194) target = $region36
        $region35: #{tpu_custom_call.1} parent=31 // pred_region
          %197 = dma.done %s190, 16384
        $region36: #{tpu_custom_call.1} parent=31 // pred_fallthru
          _
        %s198 = sand.u32 %s79, 1
        %s199 = scalar_lea.sflag [#allocation7], %s198
        %s200 = sand.u32 %s79, 1
        %s201 = smul.addr %s200, 1024
        %s202 = scalar_lea.vmem [#allocation6], %s201
        // Predicated region
        $region37: #{tpu_custom_call.1} parent=31 // pred_check
          %p203 = pneg %p92
        $region38: #{tpu_custom_call.1} parent=31 // pred_check_branch
          %205 = sbr.rel (%p203) target = $region40
        $region39: #{tpu_custom_call.1} parent=31 // pred_region
          %206 = dma.done %s199, 16384
        $region40: #{tpu_custom_call.1} parent=31 // pred_fallthru
          _
        %p207 = pneg %p40
        %p208 = pneg %p37
        %s209 = sand.u32 %s53, 1
        %s210 = scalar_lea.sflag [#allocation4], %s209
        %s211 = sand.u32 %s53, 1
        %s212 = smul.addr %s211, 1024
        %s213 = scalar_lea.vmem [#allocation3], %s212
        %p214 = pneg %p66
        %p215 = pneg %p63
        %s216 = sand.u32 %s79, 1
        %s217 = scalar_lea.sflag [#allocation7], %s216
        %s218 = sand.u32 %s79, 1
        %s219 = smul.addr %s218, 1024
        %s220 = scalar_lea.vmem [#allocation6], %s219
        %p221 = pneg %p92
        %p222 = pneg %p89
        %p223 = pneg %p118
        %p224 = pneg %p115
        %s225 = sand.u32 %s105, 1
        %s226 = scalar_lea.sflag [#allocation5], %s225
        %s227 = sand.u32 %s105, 1
        %s228 = smul.addr %s227, 1024
        %s229 = scalar_lea.vmem [#allocation8], %s228
        %s230 = smul.u32 128, %s24
        %s231 = smul.u32 128, %s24
        %s232 = smul.u32 128, %s24
        %s233 = sld [smem:[#allocation2]]
        %v234 = vld [vmem:[%s193] sm:$0xff]
        %v235 = vld [vmem:[%s193 + $0x8] sm:$0xff]
        %v236 = vld [vmem:[%s193 + $0x10] sm:$0xff]
        %v237 = vld [vmem:[%s193 + $0x18] sm:$0xff]
        %v238 = vld [vmem:[%s193 + $0x20] sm:$0xff]
        %v239 = vld [vmem:[%s193 + $0x28] sm:$0xff]
        %v240 = vld [vmem:[%s193 + $0x30] sm:$0xff]
        %v241 = vld [vmem:[%s193 + $0x38] sm:$0xff]
        %v242 = vld [vmem:[%s193 + $0x40] sm:$0xff]
        %v243 = vld [vmem:[%s193 + $0x48] sm:$0xff]
        %v244 = vld [vmem:[%s193 + $0x50] sm:$0xff]
        %v245 = vld [vmem:[%s193 + $0x58] sm:$0xff]
        %v246 = vld [vmem:[%s193 + $0x60] sm:$0xff]
        %v247 = vld [vmem:[%s193 + $0x68] sm:$0xff]
        %v248 = vld [vmem:[%s193 + $0x70] sm:$0xff]
        %v249 = vld [vmem:[%s193 + $0x78] sm:$0xff]
        %v250 = vld [vmem:[%s193 + $0x80] sm:$0xff]
        %v251 = vld [vmem:[%s193 + $0x88] sm:$0xff]
        %v252 = vld [vmem:[%s193 + $0x90] sm:$0xff]
        %v253 = vld [vmem:[%s193 + $0x98] sm:$0xff]
        %v254 = vld [vmem:[%s193 + $0xa0] sm:$0xff]
        %v255 = vld [vmem:[%s193 + $0xa8] sm:$0xff]
        %v256 = vld [vmem:[%s193 + $0xb0] sm:$0xff]
        %v257 = vld [vmem:[%s193 + $0xb8] sm:$0xff]
        %v258 = vld [vmem:[%s193 + $0xc0] sm:$0xff]
        %v259 = vld [vmem:[%s193 + $0xc8] sm:$0xff]
        %v260 = vld [vmem:[%s193 + $0xd0] sm:$0xff]
        %v261 = vld [vmem:[%s193 + $0xd8] sm:$0xff]
        %v262 = vld [vmem:[%s193 + $0xe0] sm:$0xff]
        %v263 = vld [vmem:[%s193 + $0xe8] sm:$0xff]
        %v264 = vld [vmem:[%s193 + $0xf0] sm:$0xff]
        %v265 = vld [vmem:[%s193 + $0xf8] sm:$0xff]
        %v266 = vld [vmem:[%s193 + $0x100] sm:$0xff]
        %v267 = vld [vmem:[%s193 + $0x108] sm:$0xff]
        %v268 = vld [vmem:[%s193 + $0x110] sm:$0xff]
        %v269 = vld [vmem:[%s193 + $0x118] sm:$0xff]
        %v270 = vld [vmem:[%s193 + $0x120] sm:$0xff]
        %v271 = vld [vmem:[%s193 + $0x128] sm:$0xff]
        %v272 = vld [vmem:[%s193 + $0x130] sm:$0xff]
        %v273 = vld [vmem:[%s193 + $0x138] sm:$0xff]
        %v274 = vld [vmem:[%s193 + $0x140] sm:$0xff]
        %v275 = vld [vmem:[%s193 + $0x148] sm:$0xff]
        %v276 = vld [vmem:[%s193 + $0x150] sm:$0xff]
        %v277 = vld [vmem:[%s193 + $0x158] sm:$0xff]
        %v278 = vld [vmem:[%s193 + $0x160] sm:$0xff]
        %v279 = vld [vmem:[%s193 + $0x168] sm:$0xff]
        %v280 = vld [vmem:[%s193 + $0x170] sm:$0xff]
        %v281 = vld [vmem:[%s193 + $0x178] sm:$0xff]
        %v282 = vld [vmem:[%s193 + $0x180] sm:$0xff]
        %v283 = vld [vmem:[%s193 + $0x188] sm:$0xff]
        %v284 = vld [vmem:[%s193 + $0x190] sm:$0xff]
        %v285 = vld [vmem:[%s193 + $0x198] sm:$0xff]
        %v286 = vld [vmem:[%s193 + $0x1a0] sm:$0xff]
        %v287 = vld [vmem:[%s193 + $0x1a8] sm:$0xff]
        %v288 = vld [vmem:[%s193 + $0x1b0] sm:$0xff]
        %v289 = vld [vmem:[%s193 + $0x1b8] sm:$0xff]
        %v290 = vld [vmem:[%s193 + $0x1c0] sm:$0xff]
        %v291 = vld [vmem:[%s193 + $0x1c8] sm:$0xff]
        %v292 = vld [vmem:[%s193 + $0x1d0] sm:$0xff]
        %v293 = vld [vmem:[%s193 + $0x1d8] sm:$0xff]
        %v294 = vld [vmem:[%s193 + $0x1e0] sm:$0xff]
        %v295 = vld [vmem:[%s193 + $0x1e8] sm:$0xff]
        %v296 = vld [vmem:[%s193 + $0x1f0] sm:$0xff]
        %v297 = vld [vmem:[%s193 + $0x1f8] sm:$0xff]
        %v298 = vld [vmem:[%s193 + $0x200] sm:$0xff]
        %v299 = vld [vmem:[%s193 + $0x208] sm:$0xff]
        %v300 = vld [vmem:[%s193 + $0x210] sm:$0xff]
        %v301 = vld [vmem:[%s193 + $0x218] sm:$0xff]
        %v302 = vld [vmem:[%s193 + $0x220] sm:$0xff]
        %v303 = vld [vmem:[%s193 + $0x228] sm:$0xff]
        %v304 = vld [vmem:[%s193 + $0x230] sm:$0xff]
        %v305 = vld [vmem:[%s193 + $0x238] sm:$0xff]
        %v306 = vld [vmem:[%s193 + $0x240] sm:$0xff]
        %v307 = vld [vmem:[%s193 + $0x248] sm:$0xff]
        %v308 = vld [vmem:[%s193 + $0x250] sm:$0xff]
        %v309 = vld [vmem:[%s193 + $0x258] sm:$0xff]
        %v310 = vld [vmem:[%s193 + $0x260] sm:$0xff]
        %v311 = vld [vmem:[%s193 + $0x268] sm:$0xff]
        %v312 = vld [vmem:[%s193 + $0x270] sm:$0xff]
        %v313 = vld [vmem:[%s193 + $0x278] sm:$0xff]
        %v314 = vld [vmem:[%s193 + $0x280] sm:$0xff]
        %v315 = vld [vmem:[%s193 + $0x288] sm:$0xff]
        %v316 = vld [vmem:[%s193 + $0x290] sm:$0xff]
        %v317 = vld [vmem:[%s193 + $0x298] sm:$0xff]
        %v318 = vld [vmem:[%s193 + $0x2a0] sm:$0xff]
        %v319 = vld [vmem:[%s193 + $0x2a8] sm:$0xff]
        %v320 = vld [vmem:[%s193 + $0x2b0] sm:$0xff]
        %v321 = vld [vmem:[%s193 + $0x2b8] sm:$0xff]
        %v322 = vld [vmem:[%s193 + $0x2c0] sm:$0xff]
        %v323 = vld [vmem:[%s193 + $0x2c8] sm:$0xff]
        %v324 = vld [vmem:[%s193 + $0x2d0] sm:$0xff]
        %v325 = vld [vmem:[%s193 + $0x2d8] sm:$0xff]
        %v326 = vld [vmem:[%s193 + $0x2e0] sm:$0xff]
        %v327 = vld [vmem:[%s193 + $0x2e8] sm:$0xff]
        %v328 = vld [vmem:[%s193 + $0x2f0] sm:$0xff]
        %v329 = vld [vmem:[%s193 + $0x2f8] sm:$0xff]
        %v330 = vld [vmem:[%s193 + $0x300] sm:$0xff]
        %v331 = vld [vmem:[%s193 + $0x308] sm:$0xff]
        %v332 = vld [vmem:[%s193 + $0x310] sm:$0xff]
        %v333 = vld [vmem:[%s193 + $0x318] sm:$0xff]
        %v334 = vld [vmem:[%s193 + $0x320] sm:$0xff]
        %v335 = vld [vmem:[%s193 + $0x328] sm:$0xff]
        %v336 = vld [vmem:[%s193 + $0x330] sm:$0xff]
        %v337 = vld [vmem:[%s193 + $0x338] sm:$0xff]
        %v338 = vld [vmem:[%s193 + $0x340] sm:$0xff]
        %v339 = vld [vmem:[%s193 + $0x348] sm:$0xff]
        %v340 = vld [vmem:[%s193 + $0x350] sm:$0xff]
        %v341 = vld [vmem:[%s193 + $0x358] sm:$0xff]
        %v342 = vld [vmem:[%s193 + $0x360] sm:$0xff]
        %v343 = vld [vmem:[%s193 + $0x368] sm:$0xff]
        %v344 = vld [vmem:[%s193 + $0x370] sm:$0xff]
        %v345 = vld [vmem:[%s193 + $0x378] sm:$0xff]
        %v346 = vld [vmem:[%s193 + $0x380] sm:$0xff]
        %v347 = vld [vmem:[%s193 + $0x388] sm:$0xff]
        %v348 = vld [vmem:[%s193 + $0x390] sm:$0xff]
        %v349 = vld [vmem:[%s193 + $0x398] sm:$0xff]
        %v350 = vld [vmem:[%s193 + $0x3a0] sm:$0xff]
        %v351 = vld [vmem:[%s193 + $0x3a8] sm:$0xff]
        %v352 = vld [vmem:[%s193 + $0x3b0] sm:$0xff]
        %v353 = vld [vmem:[%s193 + $0x3b8] sm:$0xff]
        %v354 = vld [vmem:[%s193 + $0x3c0] sm:$0xff]
        %v355 = vld [vmem:[%s193 + $0x3c8] sm:$0xff]
        %v356 = vld [vmem:[%s193 + $0x3d0] sm:$0xff]
        %v357 = vld [vmem:[%s193 + $0x3d8] sm:$0xff]
        %v358 = vld [vmem:[%s193 + $0x3e0] sm:$0xff]
        %v359 = vld [vmem:[%s193 + $0x3e8] sm:$0xff]
        %v360 = vld [vmem:[%s193 + $0x3f0] sm:$0xff]
        %v361 = vld [vmem:[%s193 + $0x3f8] sm:$0xff]
        %v362 = vld [vmem:[%s202] sm:$0xff]
        %v363 = vld [vmem:[%s202 + $0x8] sm:$0xff]
        %v364 = vld [vmem:[%s202 + $0x10] sm:$0xff]
        %v365 = vld [vmem:[%s202 + $0x18] sm:$0xff]
        %v366 = vld [vmem:[%s202 + $0x20] sm:$0xff]
        %v367 = vld [vmem:[%s202 + $0x28] sm:$0xff]
        %v368 = vld [vmem:[%s202 + $0x30] sm:$0xff]
        %v369 = vld [vmem:[%s202 + $0x38] sm:$0xff]
        %v370 = vld [vmem:[%s202 + $0x40] sm:$0xff]
        %v371 = vld [vmem:[%s202 + $0x48] sm:$0xff]
        %v372 = vld [vmem:[%s202 + $0x50] sm:$0xff]
        %v373 = vld [vmem:[%s202 + $0x58] sm:$0xff]
        %v374 = vld [vmem:[%s202 + $0x60] sm:$0xff]
        %v375 = vld [vmem:[%s202 + $0x68] sm:$0xff]
        %v376 = vld [vmem:[%s202 + $0x70] sm:$0xff]
        %v377 = vld [vmem:[%s202 + $0x78] sm:$0xff]
        %v378 = vld [vmem:[%s202 + $0x80] sm:$0xff]
        %v379 = vld [vmem:[%s202 + $0x88] sm:$0xff]
        %v380 = vld [vmem:[%s202 + $0x90] sm:$0xff]
        %v381 = vld [vmem:[%s202 + $0x98] sm:$0xff]
        %v382 = vld [vmem:[%s202 + $0xa0] sm:$0xff]
        %v383 = vld [vmem:[%s202 + $0xa8] sm:$0xff]
        %v384 = vld [vmem:[%s202 + $0xb0] sm:$0xff]
        %v385 = vld [vmem:[%s202 + $0xb8] sm:$0xff]
        %v386 = vld [vmem:[%s202 + $0xc0] sm:$0xff]
        %v387 = vld [vmem:[%s202 + $0xc8] sm:$0xff]
        %v388 = vld [vmem:[%s202 + $0xd0] sm:$0xff]
        %v389 = vld [vmem:[%s202 + $0xd8] sm:$0xff]
        %v390 = vld [vmem:[%s202 + $0xe0] sm:$0xff]
        %v391 = vld [vmem:[%s202 + $0xe8] sm:$0xff]
        %v392 = vld [vmem:[%s202 + $0xf0] sm:$0xff]
        %v393 = vld [vmem:[%s202 + $0xf8] sm:$0xff]
        %v394 = vld [vmem:[%s202 + $0x100] sm:$0xff]
        %v395 = vld [vmem:[%s202 + $0x108] sm:$0xff]
        %v396 = vld [vmem:[%s202 + $0x110] sm:$0xff]
        %v397 = vld [vmem:[%s202 + $0x118] sm:$0xff]
        %v398 = vld [vmem:[%s202 + $0x120] sm:$0xff]
        %v399 = vld [vmem:[%s202 + $0x128] sm:$0xff]
        %v400 = vld [vmem:[%s202 + $0x130] sm:$0xff]
        %v401 = vld [vmem:[%s202 + $0x138] sm:$0xff]
        %v402 = vld [vmem:[%s202 + $0x140] sm:$0xff]
        %v403 = vld [vmem:[%s202 + $0x148] sm:$0xff]
        %v404 = vld [vmem:[%s202 + $0x150] sm:$0xff]
        %v405 = vld [vmem:[%s202 + $0x158] sm:$0xff]
        %v406 = vld [vmem:[%s202 + $0x160] sm:$0xff]
        %v407 = vld [vmem:[%s202 + $0x168] sm:$0xff]
        %v408 = vld [vmem:[%s202 + $0x170] sm:$0xff]
        %v409 = vld [vmem:[%s202 + $0x178] sm:$0xff]
        %v410 = vld [vmem:[%s202 + $0x180] sm:$0xff]
        %v411 = vld [vmem:[%s202 + $0x188] sm:$0xff]
        %v412 = vld [vmem:[%s202 + $0x190] sm:$0xff]
        %v413 = vld [vmem:[%s202 + $0x198] sm:$0xff]
        %v414 = vld [vmem:[%s202 + $0x1a0] sm:$0xff]
        %v415 = vld [vmem:[%s202 + $0x1a8] sm:$0xff]
        %v416 = vld [vmem:[%s202 + $0x1b0] sm:$0xff]
        %v417 = vld [vmem:[%s202 + $0x1b8] sm:$0xff]
        %v418 = vld [vmem:[%s202 + $0x1c0] sm:$0xff]
        %v419 = vld [vmem:[%s202 + $0x1c8] sm:$0xff]
        %v420 = vld [vmem:[%s202 + $0x1d0] sm:$0xff]
        %v421 = vld [vmem:[%s202 + $0x1d8] sm:$0xff]
        %v422 = vld [vmem:[%s202 + $0x1e0] sm:$0xff]
        %v423 = vld [vmem:[%s202 + $0x1e8] sm:$0xff]
        %v424 = vld [vmem:[%s202 + $0x1f0] sm:$0xff]
        %v425 = vld [vmem:[%s202 + $0x1f8] sm:$0xff]
        %v426 = vld [vmem:[%s202 + $0x200] sm:$0xff]
        %v427 = vld [vmem:[%s202 + $0x208] sm:$0xff]
        %v428 = vld [vmem:[%s202 + $0x210] sm:$0xff]
        %v429 = vld [vmem:[%s202 + $0x218] sm:$0xff]
        %v430 = vld [vmem:[%s202 + $0x220] sm:$0xff]
        %v431 = vld [vmem:[%s202 + $0x228] sm:$0xff]
        %v432 = vld [vmem:[%s202 + $0x230] sm:$0xff]
        %v433 = vld [vmem:[%s202 + $0x238] sm:$0xff]
        %v434 = vld [vmem:[%s202 + $0x240] sm:$0xff]
        %v435 = vld [vmem:[%s202 + $0x248] sm:$0xff]
        %v436 = vld [vmem:[%s202 + $0x250] sm:$0xff]
        %v437 = vld [vmem:[%s202 + $0x258] sm:$0xff]
        %v438 = vld [vmem:[%s202 + $0x260] sm:$0xff]
        %v439 = vld [vmem:[%s202 + $0x268] sm:$0xff]
        %v440 = vld [vmem:[%s202 + $0x270] sm:$0xff]
        %v441 = vld [vmem:[%s202 + $0x278] sm:$0xff]
        %v442 = vld [vmem:[%s202 + $0x280] sm:$0xff]
        %v443 = vld [vmem:[%s202 + $0x288] sm:$0xff]
        %v444 = vld [vmem:[%s202 + $0x290] sm:$0xff]
        %v445 = vld [vmem:[%s202 + $0x298] sm:$0xff]
        %v446 = vld [vmem:[%s202 + $0x2a0] sm:$0xff]
        %v447 = vld [vmem:[%s202 + $0x2a8] sm:$0xff]
        %v448 = vld [vmem:[%s202 + $0x2b0] sm:$0xff]
        %v449 = vld [vmem:[%s202 + $0x2b8] sm:$0xff]
        %v450 = vld [vmem:[%s202 + $0x2c0] sm:$0xff]
        %v451 = vld [vmem:[%s202 + $0x2c8] sm:$0xff]
        %v452 = vld [vmem:[%s202 + $0x2d0] sm:$0xff]
        %v453 = vld [vmem:[%s202 + $0x2d8] sm:$0xff]
        %v454 = vld [vmem:[%s202 + $0x2e0] sm:$0xff]
        %v455 = vld [vmem:[%s202 + $0x2e8] sm:$0xff]
        %v456 = vld [vmem:[%s202 + $0x2f0] sm:$0xff]
        %v457 = vld [vmem:[%s202 + $0x2f8] sm:$0xff]
        %v458 = vld [vmem:[%s202 + $0x300] sm:$0xff]
        %v459 = vld [vmem:[%s202 + $0x308] sm:$0xff]
        %v460 = vld [vmem:[%s202 + $0x310] sm:$0xff]
        %v461 = vld [vmem:[%s202 + $0x318] sm:$0xff]
        %v462 = vld [vmem:[%s202 + $0x320] sm:$0xff]
        %v463 = vld [vmem:[%s202 + $0x328] sm:$0xff]
        %v464 = vld [vmem:[%s202 + $0x330] sm:$0xff]
        %v465 = vld [vmem:[%s202 + $0x338] sm:$0xff]
        %v466 = vld [vmem:[%s202 + $0x340] sm:$0xff]
        %v467 = vld [vmem:[%s202 + $0x348] sm:$0xff]
        %v468 = vld [vmem:[%s202 + $0x350] sm:$0xff]
        %v469 = vld [vmem:[%s202 + $0x358] sm:$0xff]
        %v470 = vld [vmem:[%s202 + $0x360] sm:$0xff]
        %v471 = vld [vmem:[%s202 + $0x368] sm:$0xff]
        %v472 = vld [vmem:[%s202 + $0x370] sm:$0xff]
        %v473 = vld [vmem:[%s202 + $0x378] sm:$0xff]
        %v474 = vld [vmem:[%s202 + $0x380] sm:$0xff]
        %v475 = vld [vmem:[%s202 + $0x388] sm:$0xff]
        %v476 = vld [vmem:[%s202 + $0x390] sm:$0xff]
        %v477 = vld [vmem:[%s202 + $0x398] sm:$0xff]
        %v478 = vld [vmem:[%s202 + $0x3a0] sm:$0xff]
        %v479 = vld [vmem:[%s202 + $0x3a8] sm:$0xff]
        %v480 = vld [vmem:[%s202 + $0x3b0] sm:$0xff]
        %v481 = vld [vmem:[%s202 + $0x3b8] sm:$0xff]
        %v482 = vld [vmem:[%s202 + $0x3c0] sm:$0xff]
        %v483 = vld [vmem:[%s202 + $0x3c8] sm:$0xff]
        %v484 = vld [vmem:[%s202 + $0x3d0] sm:$0xff]
        %v485 = vld [vmem:[%s202 + $0x3d8] sm:$0xff]
        %v486 = vld [vmem:[%s202 + $0x3e0] sm:$0xff]
        %v487 = vld [vmem:[%s202 + $0x3e8] sm:$0xff]
        %v488 = vld [vmem:[%s202 + $0x3f0] sm:$0xff]
        %v489 = vld [vmem:[%s202 + $0x3f8] sm:$0xff]
        %v490 = vtanh.pop %v234
        %v491 = vtanh.pop %v235
        %v492 = vtanh.pop %v236
        %v493 = vtanh.pop %v237
        %v494 = vtanh.pop %v238
        %v495 = vtanh.pop %v239
        %v496 = vtanh.pop %v240
        %v497 = vtanh.pop %v241
        %v498 = vtanh.pop %v242
        %v499 = vtanh.pop %v243
        %v500 = vtanh.pop %v244
        %v501 = vtanh.pop %v245
        %v502 = vtanh.pop %v246
        %v503 = vtanh.pop %v247
        %v504 = vtanh.pop %v248
        %v505 = vtanh.pop %v249
        %v506 = vtanh.pop %v250
        %v507 = vtanh.pop %v251
        %v508 = vtanh.pop %v252
        %v509 = vtanh.pop %v253
        %v510 = vtanh.pop %v254
        %v511 = vtanh.pop %v255
        %v512 = vtanh.pop %v256
        %v513 = vtanh.pop %v257
        %v514 = vtanh.pop %v258
        %v515 = vtanh.pop %v259
        %v516 = vtanh.pop %v260
        %v517 = vtanh.pop %v261
        %v518 = vtanh.pop %v262
        %v519 = vtanh.pop %v263
        %v520 = vtanh.pop %v264
        %v521 = vtanh.pop %v265
        %v522 = vtanh.pop %v266
        %v523 = vtanh.pop %v267
        %v524 = vtanh.pop %v268
        %v525 = vtanh.pop %v269
        %v526 = vtanh.pop %v270
        %v527 = vtanh.pop %v271
        %v528 = vtanh.pop %v272
        %v529 = vtanh.pop %v273
        %v530 = vtanh.pop %v274
        %v531 = vtanh.pop %v275
        %v532 = vtanh.pop %v276
        %v533 = vtanh.pop %v277
        %v534 = vtanh.pop %v278
        %v535 = vtanh.pop %v279
        %v536 = vtanh.pop %v280
        %v537 = vtanh.pop %v281
        %v538 = vtanh.pop %v282
        %v539 = vtanh.pop %v283
        %v540 = vtanh.pop %v284
        %v541 = vtanh.pop %v285
        %v542 = vtanh.pop %v286
        %v543 = vtanh.pop %v287
        %v544 = vtanh.pop %v288
        %v545 = vtanh.pop %v289
        %v546 = vtanh.pop %v290
        %v547 = vtanh.pop %v291
        %v548 = vtanh.pop %v292
        %v549 = vtanh.pop %v293
        %v550 = vtanh.pop %v294
        %v551 = vtanh.pop %v295
        %v552 = vtanh.pop %v296
        %v553 = vtanh.pop %v297
        %v554 = vtanh.pop %v298
        %v555 = vtanh.pop %v299
        %v556 = vtanh.pop %v300
        %v557 = vtanh.pop %v301
        %v558 = vtanh.pop %v302
        %v559 = vtanh.pop %v303
        %v560 = vtanh.pop %v304
        %v561 = vtanh.pop %v305
        %v562 = vtanh.pop %v306
        %v563 = vtanh.pop %v307
        %v564 = vtanh.pop %v308
        %v565 = vtanh.pop %v309
        %v566 = vtanh.pop %v310
        %v567 = vtanh.pop %v311
        %v568 = vtanh.pop %v312
        %v569 = vtanh.pop %v313
        %v570 = vtanh.pop %v314
        %v571 = vtanh.pop %v315
        %v572 = vtanh.pop %v316
        %v573 = vtanh.pop %v317
        %v574 = vtanh.pop %v318
        %v575 = vtanh.pop %v319
        %v576 = vtanh.pop %v320
        %v577 = vtanh.pop %v321
        %v578 = vtanh.pop %v322
        %v579 = vtanh.pop %v323
        %v580 = vtanh.pop %v324
        %v581 = vtanh.pop %v325
        %v582 = vtanh.pop %v326
        %v583 = vtanh.pop %v327
        %v584 = vtanh.pop %v328
        %v585 = vtanh.pop %v329
        %v586 = vtanh.pop %v330
        %v587 = vtanh.pop %v331
        %v588 = vtanh.pop %v332
        %v589 = vtanh.pop %v333
        %v590 = vtanh.pop %v334
        %v591 = vtanh.pop %v335
        %v592 = vtanh.pop %v336
        %v593 = vtanh.pop %v337
        %v594 = vtanh.pop %v338
        %v595 = vtanh.pop %v339
        %v596 = vtanh.pop %v340
        %v597 = vtanh.pop %v341
        %v598 = vtanh.pop %v342
        %v599 = vtanh.pop %v343
        %v600 = vtanh.pop %v344
        %v601 = vtanh.pop %v345
        %v602 = vtanh.pop %v346
        %v603 = vtanh.pop %v347
        %v604 = vtanh.pop %v348
        %v605 = vtanh.pop %v349
        %v606 = vtanh.pop %v350
        %v607 = vtanh.pop %v351
        %v608 = vtanh.pop %v352
        %v609 = vtanh.pop %v353
        %v610 = vtanh.pop %v354
        %v611 = vtanh.pop %v355
        %v612 = vtanh.pop %v356
        %v613 = vtanh.pop %v357
        %v614 = vtanh.pop %v358
        %v615 = vtanh.pop %v359
        %v616 = vtanh.pop %v360
        %v617 = vtanh.pop %v361
        %v618 = vstv %s233
        %v619 = vmul.f32 %v618, %v490
        %v620 = vmul.f32 %v618, %v491
        %v621 = vmul.f32 %v618, %v492
        %v622 = vmul.f32 %v618, %v493
        %v623 = vmul.f32 %v618, %v494
        %v624 = vmul.f32 %v618, %v495
        %v625 = vmul.f32 %v618, %v496
        %v626 = vmul.f32 %v618, %v497
        %v627 = vmul.f32 %v618, %v498
        %v628 = vmul.f32 %v618, %v499
        %v629 = vmul.f32 %v618, %v500
        %v630 = vmul.f32 %v618, %v501
        %v631 = vmul.f32 %v618, %v502
        %v632 = vmul.f32 %v618, %v503
        %v633 = vmul.f32 %v618, %v504
        %v634 = vmul.f32 %v618, %v505
        %v635 = vmul.f32 %v618, %v506
        %v636 = vmul.f32 %v618, %v507
        %v637 = vmul.f32 %v618, %v508
        %v638 = vmul.f32 %v618, %v509
        %v639 = vmul.f32 %v618, %v510
        %v640 = vmul.f32 %v618, %v511
        %v641 = vmul.f32 %v618, %v512
        %v642 = vmul.f32 %v618, %v513
        %v643 = vmul.f32 %v618, %v514
        %v644 = vmul.f32 %v618, %v515
        %v645 = vmul.f32 %v618, %v516
        %v646 = vmul.f32 %v618, %v517
        %v647 = vmul.f32 %v618, %v518
        %v648 = vmul.f32 %v618, %v519
        %v649 = vmul.f32 %v618, %v520
        %v650 = vmul.f32 %v618, %v521
        %v651 = vmul.f32 %v618, %v522
        %v652 = vmul.f32 %v618, %v523
        %v653 = vmul.f32 %v618, %v524
        %v654 = vmul.f32 %v618, %v525
        %v655 = vmul.f32 %v618, %v526
        %v656 = vmul.f32 %v618, %v527
        %v657 = vmul.f32 %v618, %v528
        %v658 = vmul.f32 %v618, %v529
        %v659 = vmul.f32 %v618, %v530
        %v660 = vmul.f32 %v618, %v531
        %v661 = vmul.f32 %v618, %v532
        %v662 = vmul.f32 %v618, %v533
        %v663 = vmul.f32 %v618, %v534
        %v664 = vmul.f32 %v618, %v535
        %v665 = vmul.f32 %v618, %v536
        %v666 = vmul.f32 %v618, %v537
        %v667 = vmul.f32 %v618, %v538
        %v668 = vmul.f32 %v618, %v539
        %v669 = vmul.f32 %v618, %v540
        %v670 = vmul.f32 %v618, %v541
        %v671 = vmul.f32 %v618, %v542
        %v672 = vmul.f32 %v618, %v543
        %v673 = vmul.f32 %v618, %v544
        %v674 = vmul.f32 %v618, %v545
        %v675 = vmul.f32 %v618, %v546
        %v676 = vmul.f32 %v618, %v547
        %v677 = vmul.f32 %v618, %v548
        %v678 = vmul.f32 %v618, %v549
        %v679 = vmul.f32 %v618, %v550
        %v680 = vmul.f32 %v618, %v551
        %v681 = vmul.f32 %v618, %v552
        %v682 = vmul.f32 %v618, %v553
        %v683 = vmul.f32 %v618, %v554
        %v684 = vmul.f32 %v618, %v555
        %v685 = vmul.f32 %v618, %v556
        %v686 = vmul.f32 %v618, %v557
        %v687 = vmul.f32 %v618, %v558
        %v688 = vmul.f32 %v618, %v559
        %v689 = vmul.f32 %v618, %v560
        %v690 = vmul.f32 %v618, %v561
        %v691 = vmul.f32 %v618, %v562
        %v692 = vmul.f32 %v618, %v563
        %v693 = vmul.f32 %v618, %v564
        %v694 = vmul.f32 %v618, %v565
        %v695 = vmul.f32 %v618, %v566
        %v696 = vmul.f32 %v618, %v567
        %v697 = vmul.f32 %v618, %v568
        %v698 = vmul.f32 %v618, %v569
        %v699 = vmul.f32 %v618, %v570
        %v700 = vmul.f32 %v618, %v571
        %v701 = vmul.f32 %v618, %v572
        %v702 = vmul.f32 %v618, %v573
        %v703 = vmul.f32 %v618, %v574
        %v704 = vmul.f32 %v618, %v575
        %v705 = vmul.f32 %v618, %v576
        %v706 = vmul.f32 %v618, %v577
        %v707 = vmul.f32 %v618, %v578
        %v708 = vmul.f32 %v618, %v579
        %v709 = vmul.f32 %v618, %v580
        %v710 = vmul.f32 %v618, %v581
        %v711 = vmul.f32 %v618, %v582
        %v712 = vmul.f32 %v618, %v583
        %v713 = vmul.f32 %v618, %v584
        %v714 = vmul.f32 %v618, %v585
        %v715 = vmul.f32 %v618, %v586
        %v716 = vmul.f32 %v618, %v587
        %v717 = vmul.f32 %v618, %v588
        %v718 = vmul.f32 %v618, %v589
        %v719 = vmul.f32 %v618, %v590
        %v720 = vmul.f32 %v618, %v591
        %v721 = vmul.f32 %v618, %v592
        %v722 = vmul.f32 %v618, %v593
        %v723 = vmul.f32 %v618, %v594
        %v724 = vmul.f32 %v618, %v595
        %v725 = vmul.f32 %v618, %v596
        %v726 = vmul.f32 %v618, %v597
        %v727 = vmul.f32 %v618, %v598
        %v728 = vmul.f32 %v618, %v599
        %v729 = vmul.f32 %v618, %v600
        %v730 = vmul.f32 %v618, %v601
        %v731 = vmul.f32 %v618, %v602
        %v732 = vmul.f32 %v618, %v603
        %v733 = vmul.f32 %v618, %v604
        %v734 = vmul.f32 %v618, %v605
        %v735 = vmul.f32 %v618, %v606
        %v736 = vmul.f32 %v618, %v607
        %v737 = vmul.f32 %v618, %v608
        %v738 = vmul.f32 %v618, %v609
        %v739 = vmul.f32 %v618, %v610
        %v740 = vmul.f32 %v618, %v611
        %v741 = vmul.f32 %v618, %v612
        %v742 = vmul.f32 %v618, %v613
        %v743 = vmul.f32 %v618, %v614
        %v744 = vmul.f32 %v618, %v615
        %v745 = vmul.f32 %v618, %v616
        %v746 = vmul.f32 %v618, %v617
        %v747 = vadd.f32 %v619, %v362
        %v748 = vadd.f32 %v620, %v363
        %v749 = vadd.f32 %v621, %v364
        %v750 = vadd.f32 %v622, %v365
        %v751 = vadd.f32 %v623, %v366
        %v752 = vadd.f32 %v624, %v367
        %v753 = vadd.f32 %v625, %v368
        %v754 = vadd.f32 %v626, %v369
        %v755 = vadd.f32 %v627, %v370
        %v756 = vadd.f32 %v628, %v371
        %v757 = vadd.f32 %v629, %v372
        %v758 = vadd.f32 %v630, %v373
        %v759 = vadd.f32 %v631, %v374
        %v760 = vadd.f32 %v632, %v375
        %v761 = vadd.f32 %v633, %v376
        %v762 = vadd.f32 %v634, %v377
        %v763 = vadd.f32 %v635, %v378
        %v764 = vadd.f32 %v636, %v379
        %v765 = vadd.f32 %v637, %v380
        %v766 = vadd.f32 %v638, %v381
        %v767 = vadd.f32 %v639, %v382
        %v768 = vadd.f32 %v640, %v383
        %v769 = vadd.f32 %v641, %v384
        %v770 = vadd.f32 %v642, %v385
        %v771 = vadd.f32 %v643, %v386
        %v772 = vadd.f32 %v644, %v387
        %v773 = vadd.f32 %v645, %v388
        %v774 = vadd.f32 %v646, %v389
        %v775 = vadd.f32 %v647, %v390
        %v776 = vadd.f32 %v648, %v391
        %v777 = vadd.f32 %v649, %v392
        %v778 = vadd.f32 %v650, %v393
        %v779 = vadd.f32 %v651, %v394
        %v780 = vadd.f32 %v652, %v395
        %v781 = vadd.f32 %v653, %v396
        %v782 = vadd.f32 %v654, %v397
        %v783 = vadd.f32 %v655, %v398
        %v784 = vadd.f32 %v656, %v399
        %v785 = vadd.f32 %v657, %v400
        %v786 = vadd.f32 %v658, %v401
        %v787 = vadd.f32 %v659, %v402
        %v788 = vadd.f32 %v660, %v403
        %v789 = vadd.f32 %v661, %v404
        %v790 = vadd.f32 %v662, %v405
        %v791 = vadd.f32 %v663, %v406
        %v792 = vadd.f32 %v664, %v407
        %v793 = vadd.f32 %v665, %v408
        %v794 = vadd.f32 %v666, %v409
        %v795 = vadd.f32 %v667, %v410
        %v796 = vadd.f32 %v668, %v411
        %v797 = vadd.f32 %v669, %v412
        %v798 = vadd.f32 %v670, %v413
        %v799 = vadd.f32 %v671, %v414
        %v800 = vadd.f32 %v672, %v415
        %v801 = vadd.f32 %v673, %v416
        %v802 = vadd.f32 %v674, %v417
        %v803 = vadd.f32 %v675, %v418
        %v804 = vadd.f32 %v676, %v419
        %v805 = vadd.f32 %v677, %v420
        %v806 = vadd.f32 %v678, %v421
        %v807 = vadd.f32 %v679, %v422
        %v808 = vadd.f32 %v680, %v423
        %v809 = vadd.f32 %v681, %v424
        %v810 = vadd.f32 %v682, %v425
        %v811 = vadd.f32 %v683, %v426
        %v812 = vadd.f32 %v684, %v427
        %v813 = vadd.f32 %v685, %v428
        %v814 = vadd.f32 %v686, %v429
        %v815 = vadd.f32 %v687, %v430
        %v816 = vadd.f32 %v688, %v431
        %v817 = vadd.f32 %v689, %v432
        %v818 = vadd.f32 %v690, %v433
        %v819 = vadd.f32 %v691, %v434
        %v820 = vadd.f32 %v692, %v435
        %v821 = vadd.f32 %v693, %v436
        %v822 = vadd.f32 %v694, %v437
        %v823 = vadd.f32 %v695, %v438
        %v824 = vadd.f32 %v696, %v439
        %v825 = vadd.f32 %v697, %v440
        %v826 = vadd.f32 %v698, %v441
        %v827 = vadd.f32 %v699, %v442
        %v828 = vadd.f32 %v700, %v443
        %v829 = vadd.f32 %v701, %v444
        %v830 = vadd.f32 %v702, %v445
        %v831 = vadd.f32 %v703, %v446
        %v832 = vadd.f32 %v704, %v447
        %v833 = vadd.f32 %v705, %v448
        %v834 = vadd.f32 %v706, %v449
        %v835 = vadd.f32 %v707, %v450
        %v836 = vadd.f32 %v708, %v451
        %v837 = vadd.f32 %v709, %v452
        %v838 = vadd.f32 %v710, %v453
        %v839 = vadd.f32 %v711, %v454
        %v840 = vadd.f32 %v712, %v455
        %v841 = vadd.f32 %v713, %v456
        %v842 = vadd.f32 %v714, %v457
        %v843 = vadd.f32 %v715, %v458
        %v844 = vadd.f32 %v716, %v459
        %v845 = vadd.f32 %v717, %v460
        %v846 = vadd.f32 %v718, %v461
        %v847 = vadd.f32 %v719, %v462
        %v848 = vadd.f32 %v720, %v463
        %v849 = vadd.f32 %v721, %v464
        %v850 = vadd.f32 %v722, %v465
        %v851 = vadd.f32 %v723, %v466
        %v852 = vadd.f32 %v724, %v467
        %v853 = vadd.f32 %v725, %v468
        %v854 = vadd.f32 %v726, %v469
        %v855 = vadd.f32 %v727, %v470
        %v856 = vadd.f32 %v728, %v471
        %v857 = vadd.f32 %v729, %v472
        %v858 = vadd.f32 %v730, %v473
        %v859 = vadd.f32 %v731, %v474
        %v860 = vadd.f32 %v732, %v475
        %v861 = vadd.f32 %v733, %v476
        %v862 = vadd.f32 %v734, %v477
        %v863 = vadd.f32 %v735, %v478
        %v864 = vadd.f32 %v736, %v479
        %v865 = vadd.f32 %v737, %v480
        %v866 = vadd.f32 %v738, %v481
        %v867 = vadd.f32 %v739, %v482
        %v868 = vadd.f32 %v740, %v483
        %v869 = vadd.f32 %v741, %v484
        %v870 = vadd.f32 %v742, %v485
        %v871 = vadd.f32 %v743, %v486
        %v872 = vadd.f32 %v744, %v487
        %v873 = vadd.f32 %v745, %v488
        %v874 = vadd.f32 %v746, %v489
        %875 = vst [vmem:[%s229] sm:$0xff] %v747
        %876 = vst [vmem:[%s229 + $0x8] sm:$0xff] %v748
        %877 = vst [vmem:[%s229 + $0x10] sm:$0xff] %v749
        %878 = vst [vmem:[%s229 + $0x18] sm:$0xff] %v750
        %879 = vst [vmem:[%s229 + $0x20] sm:$0xff] %v751
        %880 = vst [vmem:[%s229 + $0x28] sm:$0xff] %v752
        %881 = vst [vmem:[%s229 + $0x30] sm:$0xff] %v753
        %882 = vst [vmem:[%s229 + $0x38] sm:$0xff] %v754
        %883 = vst [vmem:[%s229 + $0x40] sm:$0xff] %v755
        %884 = vst [vmem:[%s229 + $0x48] sm:$0xff] %v756
        %885 = vst [vmem:[%s229 + $0x50] sm:$0xff] %v757
        %886 = vst [vmem:[%s229 + $0x58] sm:$0xff] %v758
        %887 = vst [vmem:[%s229 + $0x60] sm:$0xff] %v759
        %888 = vst [vmem:[%s229 + $0x68] sm:$0xff] %v760
        %889 = vst [vmem:[%s229 + $0x70] sm:$0xff] %v761
        %890 = vst [vmem:[%s229 + $0x78] sm:$0xff] %v762
        %891 = vst [vmem:[%s229 + $0x80] sm:$0xff] %v763
        %892 = vst [vmem:[%s229 + $0x88] sm:$0xff] %v764
        %893 = vst [vmem:[%s229 + $0x90] sm:$0xff] %v765
        %894 = vst [vmem:[%s229 + $0x98] sm:$0xff] %v766
        %895 = vst [vmem:[%s229 + $0xa0] sm:$0xff] %v767
        %896 = vst [vmem:[%s229 + $0xa8] sm:$0xff] %v768
        %897 = vst [vmem:[%s229 + $0xb0] sm:$0xff] %v769
        %898 = vst [vmem:[%s229 + $0xb8] sm:$0xff] %v770
        %899 = vst [vmem:[%s229 + $0xc0] sm:$0xff] %v771
        %900 = vst [vmem:[%s229 + $0xc8] sm:$0xff] %v772
        %901 = vst [vmem:[%s229 + $0xd0] sm:$0xff] %v773
        %902 = vst [vmem:[%s229 + $0xd8] sm:$0xff] %v774
        %903 = vst [vmem:[%s229 + $0xe0] sm:$0xff] %v775
        %904 = vst [vmem:[%s229 + $0xe8] sm:$0xff] %v776
        %905 = vst [vmem:[%s229 + $0xf0] sm:$0xff] %v777
        %906 = vst [vmem:[%s229 + $0xf8] sm:$0xff] %v778
        %907 = vst [vmem:[%s229 + $0x100] sm:$0xff] %v779
        %908 = vst [vmem:[%s229 + $0x108] sm:$0xff] %v780
        %909 = vst [vmem:[%s229 + $0x110] sm:$0xff] %v781
        %910 = vst [vmem:[%s229 + $0x118] sm:$0xff] %v782
        %911 = vst [vmem:[%s229 + $0x120] sm:$0xff] %v783
        %912 = vst [vmem:[%s229 + $0x128] sm:$0xff] %v784
        %913 = vst [vmem:[%s229 + $0x130] sm:$0xff] %v785
        %914 = vst [vmem:[%s229 + $0x138] sm:$0xff] %v786
        %915 = vst [vmem:[%s229 + $0x140] sm:$0xff] %v787
        %916 = vst [vmem:[%s229 + $0x148] sm:$0xff] %v788
        %917 = vst [vmem:[%s229 + $0x150] sm:$0xff] %v789
        %918 = vst [vmem:[%s229 + $0x158] sm:$0xff] %v790
        %919 = vst [vmem:[%s229 + $0x160] sm:$0xff] %v791
        %920 = vst [vmem:[%s229 + $0x168] sm:$0xff] %v792
        %921 = vst [vmem:[%s229 + $0x170] sm:$0xff] %v793
        %922 = vst [vmem:[%s229 + $0x178] sm:$0xff] %v794
        %923 = vst [vmem:[%s229 + $0x180] sm:$0xff] %v795
        %924 = vst [vmem:[%s229 + $0x188] sm:$0xff] %v796
        %925 = vst [vmem:[%s229 + $0x190] sm:$0xff] %v797
        %926 = vst [vmem:[%s229 + $0x198] sm:$0xff] %v798
        %927 = vst [vmem:[%s229 + $0x1a0] sm:$0xff] %v799
        %928 = vst [vmem:[%s229 + $0x1a8] sm:$0xff] %v800
        %929 = vst [vmem:[%s229 + $0x1b0] sm:$0xff] %v801
        %930 = vst [vmem:[%s229 + $0x1b8] sm:$0xff] %v802
        %931 = vst [vmem:[%s229 + $0x1c0] sm:$0xff] %v803
        %932 = vst [vmem:[%s229 + $0x1c8] sm:$0xff] %v804
        %933 = vst [vmem:[%s229 + $0x1d0] sm:$0xff] %v805
        %934 = vst [vmem:[%s229 + $0x1d8] sm:$0xff] %v806
        %935 = vst [vmem:[%s229 + $0x1e0] sm:$0xff] %v807
        %936 = vst [vmem:[%s229 + $0x1e8] sm:$0xff] %v808
        %937 = vst [vmem:[%s229 + $0x1f0] sm:$0xff] %v809
        %938 = vst [vmem:[%s229 + $0x1f8] sm:$0xff] %v810
        %939 = vst [vmem:[%s229 + $0x200] sm:$0xff] %v811
        %940 = vst [vmem:[%s229 + $0x208] sm:$0xff] %v812
        %941 = vst [vmem:[%s229 + $0x210] sm:$0xff] %v813
        %942 = vst [vmem:[%s229 + $0x218] sm:$0xff] %v814
        %943 = vst [vmem:[%s229 + $0x220] sm:$0xff] %v815
        %944 = vst [vmem:[%s229 + $0x228] sm:$0xff] %v816
        %945 = vst [vmem:[%s229 + $0x230] sm:$0xff] %v817
        %946 = vst [vmem:[%s229 + $0x238] sm:$0xff] %v818
        %947 = vst [vmem:[%s229 + $0x240] sm:$0xff] %v819
        %948 = vst [vmem:[%s229 + $0x248] sm:$0xff] %v820
        %949 = vst [vmem:[%s229 + $0x250] sm:$0xff] %v821
        %950 = vst [vmem:[%s229 + $0x258] sm:$0xff] %v822
        %951 = vst [vmem:[%s229 + $0x260] sm:$0xff] %v823
        %952 = vst [vmem:[%s229 + $0x268] sm:$0xff] %v824
        %953 = vst [vmem:[%s229 + $0x270] sm:$0xff] %v825
        %954 = vst [vmem:[%s229 + $0x278] sm:$0xff] %v826
        %955 = vst [vmem:[%s229 + $0x280] sm:$0xff] %v827
        %956 = vst [vmem:[%s229 + $0x288] sm:$0xff] %v828
        %957 = vst [vmem:[%s229 + $0x290] sm:$0xff] %v829
        %958 = vst [vmem:[%s229 + $0x298] sm:$0xff] %v830
        %959 = vst [vmem:[%s229 + $0x2a0] sm:$0xff] %v831
        %960 = vst [vmem:[%s229 + $0x2a8] sm:$0xff] %v832
        %961 = vst [vmem:[%s229 + $0x2b0] sm:$0xff] %v833
        %962 = vst [vmem:[%s229 + $0x2b8] sm:$0xff] %v834
        %963 = vst [vmem:[%s229 + $0x2c0] sm:$0xff] %v835
        %964 = vst [vmem:[%s229 + $0x2c8] sm:$0xff] %v836
        %965 = vst [vmem:[%s229 + $0x2d0] sm:$0xff] %v837
        %966 = vst [vmem:[%s229 + $0x2d8] sm:$0xff] %v838
        %967 = vst [vmem:[%s229 + $0x2e0] sm:$0xff] %v839
        %968 = vst [vmem:[%s229 + $0x2e8] sm:$0xff] %v840
        %969 = vst [vmem:[%s229 + $0x2f0] sm:$0xff] %v841
        %970 = vst [vmem:[%s229 + $0x2f8] sm:$0xff] %v842
        %971 = vst [vmem:[%s229 + $0x300] sm:$0xff] %v843
        %972 = vst [vmem:[%s229 + $0x308] sm:$0xff] %v844
        %973 = vst [vmem:[%s229 + $0x310] sm:$0xff] %v845
        %974 = vst [vmem:[%s229 + $0x318] sm:$0xff] %v846
        %975 = vst [vmem:[%s229 + $0x320] sm:$0xff] %v847
        %976 = vst [vmem:[%s229 + $0x328] sm:$0xff] %v848
        %977 = vst [vmem:[%s229 + $0x330] sm:$0xff] %v849
        %978 = vst [vmem:[%s229 + $0x338] sm:$0xff] %v850
        %979 = vst [vmem:[%s229 + $0x340] sm:$0xff] %v851
        %980 = vst [vmem:[%s229 + $0x348] sm:$0xff] %v852
        %981 = vst [vmem:[%s229 + $0x350] sm:$0xff] %v853
        %982 = vst [vmem:[%s229 + $0x358] sm:$0xff] %v854
        %983 = vst [vmem:[%s229 + $0x360] sm:$0xff] %v855
        %984 = vst [vmem:[%s229 + $0x368] sm:$0xff] %v856
        %985 = vst [vmem:[%s229 + $0x370] sm:$0xff] %v857
        %986 = vst [vmem:[%s229 + $0x378] sm:$0xff] %v858
        %987 = vst [vmem:[%s229 + $0x380] sm:$0xff] %v859
        %988 = vst [vmem:[%s229 + $0x388] sm:$0xff] %v860
        %989 = vst [vmem:[%s229 + $0x390] sm:$0xff] %v861
        %990 = vst [vmem:[%s229 + $0x398] sm:$0xff] %v862
        %991 = vst [vmem:[%s229 + $0x3a0] sm:$0xff] %v863
        %992 = vst [vmem:[%s229 + $0x3a8] sm:$0xff] %v864
        %993 = vst [vmem:[%s229 + $0x3b0] sm:$0xff] %v865
        %994 = vst [vmem:[%s229 + $0x3b8] sm:$0xff] %v866
        %995 = vst [vmem:[%s229 + $0x3c0] sm:$0xff] %v867
        %996 = vst [vmem:[%s229 + $0x3c8] sm:$0xff] %v868
        %997 = vst [vmem:[%s229 + $0x3d0] sm:$0xff] %v869
        %998 = vst [vmem:[%s229 + $0x3d8] sm:$0xff] %v870
        %999 = vst [vmem:[%s229 + $0x3e0] sm:$0xff] %v871
        %1000 = vst [vmem:[%s229 + $0x3e8] sm:$0xff] %v872
        %1001 = vst [vmem:[%s229 + $0x3f0] sm:$0xff] %v873
        %1002 = vst [vmem:[%s229 + $0x3f8] sm:$0xff] %v874
        %s1003 = sand.u32 %s105, 1
        %s1004 = scalar_lea.sflag [#allocation5], %s1003
        %s1005 = sand.u32 %s105, 1
        %s1006 = smul.addr %s1005, 1024
        %s1007 = scalar_lea.vmem [#allocation8], %s1006
        // Predicated region
        $region41: #{tpu_custom_call.1} parent=31 // pred_check
          %p1008 = pneg %p115
        $region42: #{tpu_custom_call.1} parent=31 // pred_check_branch
          %1010 = sbr.rel (%p1008) target = $region44
        $region43: #{tpu_custom_call.1} parent=31 // pred_region
          %s1011 = smul.u32 128, %s24
          %s1013 = ssub.s32 16384, 16384
          %1014 = vsyncadd %s1004, %s1013
          %s1015 = smul.addr %s1011, 128
          %s1016 = scalar_lea.hbm %s3, %s1015
          %s1017 = sshll.u32 %s1007, 4
          %s1018 = int_to_ptr.vmem [resolvable:$true] %s1017
          %1023 = dma.vmem_to_hbm [thread:$0]  %s1018, 16384, %s1016, %s1004, 128, 128, 8
        $region44: #{tpu_custom_call.1} parent=31 // pred_fallthru
          _
      $region32: #{tpu_custom_call.1} parent=5 // pred_fallthru
        _
      %p1024 = scmp.le.s32.totalorder 2, %s19
      // Predicated region
      $region45: #{tpu_custom_call.1} parent=5 // pred_check
        %p1025 = pneg %p1024
      $region46: #{tpu_custom_call.1} parent=5 // pred_check_branch
        %1027 = sbr.rel (%p1025) target = $region48
      $region47: #{tpu_custom_call.1} parent=5 // pred_region
        %s1028 = ssub.s32 %s19, 2
        // Predicated region
        $region49: #{tpu_custom_call.1} parent=47 // pred_check
          %p1029 = pneg %p121
        $region50: #{tpu_custom_call.1} parent=47 // pred_check_branch
          %1031 = sbr.rel (%p1029) target = $region52
        $region51: #{tpu_custom_call.1} parent=47 // pred_region
          %s1032 = sand.u32 %s106, 1
          %s1033 = scalar_lea.sflag [#allocation5], %s1032
          %s1034 = sand.u32 %s106, 1
          %s1035 = smul.addr %s1034, 1024
          %s1036 = scalar_lea.vmem [#allocation8], %s1035
          %1037 = dma.done %s1033, 16384
        $region52: #{tpu_custom_call.1} parent=47 // pred_fallthru
          _
      $region48: #{tpu_custom_call.1} parent=5 // pred_fallthru
        _
    $region6: #{tpu_custom_call.1} parent=1 // loop_footer
      %s23 = sadd.s32 1, %s19
    $region7: #{tpu_custom_call.1} parent=1 // loop_footer_branch
      %18 = sbr.rel target = $region3
    $region8: #{tpu_custom_call.1} parent=1 // loop_exit
      _
    %1038 = vsyncpa [#allocation4], 1
    %s1039 = scalar_lea.sflag [#allocation4], 1
    %1040 = vsyncpa %s1039, 1
    %1041 = vsyncpa [#allocation7], 1
    %s1042 = scalar_lea.sflag [#allocation7], 1
    %1043 = vsyncpa %s1042, 1
    %1044 = vsyncpa [#allocation5], 1
    %s1045 = scalar_lea.sflag [#allocation5], 1
    %1046 = vsyncpa %s1045, 1

</llo_original>
